<compile_context>
chip_gen: v7x
topology: tpu7x:2x2x1
jax: 0.10.0
libtpu: 0.0.40
codegen_flags: <defaults>
</compile_context>

<pallas_src>
import jax
import jax.numpy as jnp
from jax.experimental import pallas as pl
from jax.experimental.pallas import tpu as pltpu

_LANE = 128


def _round_up(x, m):
    return -(-x // m) * m


def phase_encoding_kernel(x_ref, onehot_ref, emb_ref, o_ref):
    # x_ref:      (TR, Dg)  row tile of the input (native dtype)
    # onehot_ref: (TR, Pg)  active-phase indicators per row
    # emb_ref:    (Pg, Dg)  (block-diagonal) embedding table, grid-resident
    # o_ref:      (TR, Dg)
    oh = onehot_ref[...].astype(emb_ref.dtype)          # 0/1 values: exact cast
    phase = jnp.dot(oh, emb_ref[...], preferred_element_type=jnp.float32)
    # Add in x's native dtype -> no full-tile f32 round trip of the big operand.
    o_ref[...] = x_ref[...] + phase.astype(x_ref.dtype)


def _vmem_budgets():
    """(streamed working-set budget, scoped VMEM limit) in bytes, per generation."""
    cap = 64 * 1024 * 1024                               # conservative (v7x) fallback
    try:
        cap = int(getattr(pltpu.get_tpu_info(), "vmem_capacity_bytes", cap)) or cap
    except Exception:
        pass
    limit = min((cap * 3) // 4, 96 * 1024 * 1024)        # ~48 MiB v7x, ~96 MiB v5e/v6e
    return limit // 3, limit


def _pick_row_tile(n_rows, d_eff, p_eff, x_bytes, out_bytes, oh_bytes, budget_bytes):
    """Largest multiple-of-8 row tile whose VMEM working set (double-buffered
    x / out / one-hot tiles with lane padding + the single f32 dot result)
    fits `budget_bytes`; capped so the grid has >= 4 blocks for nontrivial R."""
    d_pad = _round_up(d_eff, _LANE)
    p_pad = _round_up(p_eff, _LANE)
    per_row = 2 * (d_pad * (x_bytes + out_bytes) + p_pad * oh_bytes) + d_pad * 4
    tr = max(8, min(int(budget_bytes // per_row), 2048))
    tr = (tr // 8) * 8
    if n_rows >= 32:
        tr = min(tr, _round_up(-(-n_rows // 4), 8))      # keep >= 4 grid blocks
    if tr >= n_rows:
        return n_rows                                     # single full-extent block
    return tr


def phase_encoding(x, phase_one_hot, emb_table, *, donate_x=False):
    """out = x + phase_one_hot @ emb_table  (dropout: eval-mode identity).

    x: (S, B, D), phase_one_hot: (S, B, P+1), emb_table: (P+1, D).
    """
    S, B, D = x.shape
    P1, De = emb_table.shape
    assert De == D and phase_one_hot.shape == (S, B, P1)

    R = S * B
    out_dtype = x.dtype

    # Lane-dense packing: pack g rows per 128-lane block when D < 128. x and
    # one-hot reshapes are contiguous (free); the embedding table becomes a
    # tiny block-diagonal (g*P1, g*D) matrix.
    g = 1
    if D < _LANE and _LANE % D == 0:
        cand = _LANE // D
        if R % cand == 0:
            g = cand
    Rg, Dg, Pg = R // g, g * D, g * P1

    x2 = x.reshape(Rg, Dg)
    oh2 = phase_one_hot.reshape(Rg, Pg)                  # dtype cast happens in-kernel
    if g > 1:
        emb2 = jnp.kron(jnp.eye(g, dtype=emb_table.dtype), emb_table)
    else:
        emb2 = emb_table

    budget, vmem_limit = _vmem_budgets()
    TR = _pick_row_tile(
        Rg, Dg, Pg,
        jnp.dtype(x.dtype).itemsize,
        jnp.dtype(out_dtype).itemsize,
        jnp.dtype(oh2.dtype).itemsize,
        budget,
    )
    n_blocks = -(-Rg // TR)                              # ragged last block is masked

    out2 = pl.pallas_call(
        phase_encoding_kernel,
        out_shape=jax.ShapeDtypeStruct((Rg, Dg), out_dtype),
        grid=(n_blocks,),
        in_specs=[
            pl.BlockSpec((TR, Dg), lambda i: (i, 0)),
            pl.BlockSpec((TR, Pg), lambda i: (i, 0)),
            # Constant block index -> embedding table fetched once, kept resident.
            pl.BlockSpec((Pg, Dg), lambda i: (0, 0)),
        ],
        out_specs=pl.BlockSpec((TR, Dg), lambda i: (i, 0)),
        input_output_aliases=({0: 0} if donate_x else {}),
        compiler_params=pltpu.CompilerParams(
            dimension_semantics=("parallel",),
            vmem_limit_bytes=vmem_limit,
        ),
    )(x2, oh2, emb2)

    return out2.reshape(S, B, D)


if __name__ == "__main__":
    # Small shapes consistent with the module's forward.
    seq_len, batch, d_model, n_phases = 8, 2, 32, 4
    P1 = n_phases + 1

    key = jax.random.PRNGKey(0)
    k_x, k_emb, k_ph = jax.random.split(key, 3)

    x = jax.random.normal(k_x, (seq_len, batch, d_model), dtype=jnp.float32)
    # nn.Embedding-style weights; rounded to bf16-representable values so the
    # MXU contraction (which may use bf16 passes at default precision) agrees
    # with the f32 reference to ~ulp. One-hot entries are exactly 0/1 anyway.
    emb_table = jax.random.normal(k_emb, (P1, d_model), dtype=jnp.float32)
    emb_table = emb_table.astype(jnp.bfloat16).astype(jnp.float32)
    phase_one_hot = (jax.random.uniform(k_ph, (seq_len, batch, P1)) > 0.5
                     ).astype(jnp.float32)

    out = phase_encoding(x, phase_one_hot, emb_table)
    out = jax.block_until_ready(out)

    # Pure-JAX reference (same math as the PyTorch loop, dropout in eval mode).
    ref = x + jnp.einsum("sbp,pd->sbd", phase_one_hot, emb_table)
    assert out.shape == (seq_len, batch, d_model)
    assert jnp.allclose(out, ref, atol=1e-5, rtol=1e-5), float(
        jnp.max(jnp.abs(out - ref)))

    print("KERNEL_OK")
</pallas_src>

<mosaic_0001>
module attributes {stable_mosaic.version = 11 : i64} {
  func.func @phase_encoding_kernel(%arg0: i32, %arg1: memref<4x128xf32, #tpu.memory_space<vmem>>, %arg2: memref<4x20xf32, #tpu.memory_space<vmem>>, %arg3: memref<20x128xf32, #tpu.memory_space<vmem>>, %arg4: memref<4x128xf32, #tpu.memory_space<vmem>>) attributes {dimension_semantics = [#tpu.dimension_semantics<parallel>], iteration_bounds = array<i64: 1>, scalar_prefetch = 0 : i64, scratch_operands = 0 : i64, tpu.core_type = #tpu.core_type<tc>, window_params = [{transform_indices = @transform_0, window_bounds = array<i64: 4, 128>}, {transform_indices = @transform_1, window_bounds = array<i64: 4, 20>}, {pipeline_mode = #tpu.pipeline_mode<synchronous>, transform_indices = @transform_2, window_bounds = array<i64: 20, 128>}, {transform_indices = @transform_3, window_bounds = array<i64: 4, 128>}]} {
    %c0 = arith.constant 0 : index
    %c0_0 = arith.constant 0 : index
    %0 = vector.load %arg2[%c0, %c0_0] : memref<4x20xf32, #tpu.memory_space<vmem>>, vector<4x20xf32>
    %c0_1 = arith.constant 0 : index
    %c0_2 = arith.constant 0 : index
    %1 = vector.load %arg3[%c0_1, %c0_2] : memref<20x128xf32, #tpu.memory_space<vmem>>, vector<20x128xf32>
    %cst = arith.constant dense<0.000000e+00> : vector<4x128xf32>
    %2 = tpu.matmul %0, %1, %cst {dimension_numbers = #tpu.dot_dimension_numbers<[1], [0], [0], [1], [0, 0, 1, 1], [], []>} : vector<4x20xf32>, vector<20x128xf32>, vector<4x128xf32> -> vector<4x128xf32>
    %c0_3 = arith.constant 0 : index
    %c0_4 = arith.constant 0 : index
    %3 = vector.load %arg1[%c0_3, %c0_4] : memref<4x128xf32, #tpu.memory_space<vmem>>, vector<4x128xf32>
    %4 = arith.addf %3, %2 : vector<4x128xf32>
    %c0_5 = arith.constant 0 : index
    %c0_6 = arith.constant 0 : index
    %5 = vector.load %arg4[%c0_5, %c0_6] : memref<4x128xf32, #tpu.memory_space<vmem>>, vector<4x128xf32>
    tpu.vector_store %arg4[%c0_5, %c0_6], %4 {strides = array<i32>} : memref<4x128xf32, #tpu.memory_space<vmem>>, vector<4x128xf32>,
    return
  }
  func.func @transform_0(%arg0: i32) -> (i32, i32) {
    %c0_i32 = arith.constant 0 : i32
    %c0_i32_0 = arith.constant 0 : i32
    return %arg0, %c0_i32 : i32, i32
  }
  func.func @transform_1(%arg0: i32) -> (i32, i32) {
    %c0_i32 = arith.constant 0 : i32
    %c0_i32_0 = arith.constant 0 : i32
    return %arg0, %c0_i32 : i32, i32
  }
  func.func @transform_2(%arg0: i32) -> (i32, i32) {
    %c0_i32 = arith.constant 0 : i32
    %c0_i32_0 = arith.constant 0 : i32
    %c0_i32_1 = arith.constant 0 : i32
    return %c0_i32, %c0_i32_0 : i32, i32
  }
  func.func @transform_3(%arg0: i32) -> (i32, i32) {
    %c0_i32 = arith.constant 0 : i32
    %c0_i32_0 = arith.constant 0 : i32
    return %arg0, %c0_i32 : i32, i32
  }
}

</mosaic_0001>

<llo_original>
// kernel: tpu_custom_call.1
$region0: #{tpu_custom_call.1}
  #allocation0 [shape = 'u32[]', space=smem, size = 0x4, offset = 0x4, fixed_abs, tag = 'smem constant byte address 0x4 - core index']
  #allocation1 [shape = 'u32[144,128]{1,0:T(1,128)}', space=vmem, size = 0x12000, scoped, tag = 'internal scratch']
  %s0 = inlined_call_operand.hbm [shape: f32[4,128], index: 0, kind: input, shape index: {}]
  %s1 = inlined_call_operand.hbm [shape: f32[4,20], index: 1, kind: input, shape index: {}]
  %s2 = inlined_call_operand.hbm [shape: f32[20,128], index: 2, kind: input, shape index: {}]
  %s3 = inlined_call_operand.hbm [shape: f32[4,128], index: 3, kind: output, shape index: {}]
  %s4 = sld [smem:[#allocation0]]
  $region34: #{tpu_custom_call.1} parent=0
    _
  %s6 = ssub.s32 1, %s4
  %s7 = scalar_select 0, %s6, %s4
  $region1: #{tpu_custom_call.1} parent=0
    #allocation2 [shape = 'u8[2048]{0}', space=vmem, size = 0x800, scoped, tag = 'input window, operand 0, single buffered']
    #allocation3 [shape = 's32[1]{0}', space=sflag, size = 0x4, scoped, tag = 'scoped memory for tpu_custom_call.1']
    #allocation4 [shape = 's32[1]{0}', space=sflag, size = 0x4, scoped, tag = 'scoped memory for tpu_custom_call.1']
    #allocation5 [shape = 'u8[2048]{0}', space=vmem, size = 0x800, scoped, tag = 'input window, operand 1, single buffered']
    #allocation6 [shape = 's32[1]{0}', space=sflag, size = 0x4, scoped, tag = 'scoped memory for tpu_custom_call.1']
    #allocation7 [shape = 'u8[12288]{0}', space=vmem, size = 0x3000, scoped, tag = 'input window, operand 2, single buffered']
    #allocation8 [shape = 'u8[2048]{0}', space=vmem, size = 0x800, scoped, tag = 'output window, operand 0, single buffered']
    %8 = vsyncpa [#allocation3], 0
    %9 = vsyncpa [#allocation6], 0
    %10 = vsyncpa [#allocation4], 0
    // Predicated region
    $region2: #{tpu_custom_call.1} parent=1 // pred_check
      _
    $region3: #{tpu_custom_call.1} parent=1 // pred_check_branch
      %12 = sbr.rel (0) target = $region5
    $region4: #{tpu_custom_call.1} parent=1 // pred_region
      %s14 = ssub.s32 64, 64
      %15 = vsyncadd [#allocation3], %s14
      %s17 = sshll.u32 [#allocation2], 4
      %s18 = int_to_ptr.vmem [resolvable:$true] %s17
      %20 = dma.hbm_to_vmem [thread:$0]  %s0, 64, %s18, [#allocation3]
    $region5: #{tpu_custom_call.1} parent=1 // pred_fallthru
      _
    // Predicated region
    $region6: #{tpu_custom_call.1} parent=1 // pred_check
      _
    $region7: #{tpu_custom_call.1} parent=1 // pred_check_branch
      %22 = sbr.rel (0) target = $region9
    $region8: #{tpu_custom_call.1} parent=1 // pred_region
      %s24 = ssub.s32 64, 64
      %25 = vsyncadd [#allocation6], %s24
      %s27 = sshll.u32 [#allocation5], 4
      %s28 = int_to_ptr.vmem [resolvable:$true] %s27
      %30 = dma.hbm_to_vmem [thread:$0]  %s1, 64, %s28, [#allocation6]
    $region9: #{tpu_custom_call.1} parent=1 // pred_fallthru
      _
    // Predicated region
    $region10: #{tpu_custom_call.1} parent=1 // pred_check
      _
    $region11: #{tpu_custom_call.1} parent=1 // pred_check_branch
      %32 = sbr.rel (0) target = $region13
    $region12: #{tpu_custom_call.1} parent=1 // pred_region
      %s34 = ssub.s32 384, 384
      %35 = vsyncadd [#allocation6], %s34
      %s36 = sshll.u32 [#allocation7], 4
      %s37 = int_to_ptr.vmem [resolvable:$true] %s36
      %42 = dma.hbm_to_vmem [thread:$0]  %s2, 384, %s37, [#allocation6], 128, 128, 8
    $region13: #{tpu_custom_call.1} parent=1 // pred_fallthru
      _
    // Predicated region
    $region14: #{tpu_custom_call.1} parent=1 // pred_check
      _
    $region15: #{tpu_custom_call.1} parent=1 // pred_check_branch
      %44 = sbr.rel (0) target = $region17
    $region16: #{tpu_custom_call.1} parent=1 // pred_region
      %45 = dma.done [#allocation3], 64
    $region17: #{tpu_custom_call.1} parent=1 // pred_fallthru
      _
    // Predicated region
    $region18: #{tpu_custom_call.1} parent=1 // pred_check
      _
    $region19: #{tpu_custom_call.1} parent=1 // pred_check_branch
      %47 = sbr.rel (0) target = $region21
    $region20: #{tpu_custom_call.1} parent=1 // pred_region
      %48 = dma.done [#allocation6], 64
    $region21: #{tpu_custom_call.1} parent=1 // pred_fallthru
      _
    // Predicated region
    $region22: #{tpu_custom_call.1} parent=1 // pred_check
      _
    $region23: #{tpu_custom_call.1} parent=1 // pred_check_branch
      %50 = sbr.rel (0) target = $region25
    $region24: #{tpu_custom_call.1} parent=1 // pred_region
      %51 = dma.done [#allocation6], 384
    $region25: #{tpu_custom_call.1} parent=1 // pred_fallthru
      _
    %v52 = vld [vmem:[#allocation5] sm:$0xf]
    %v53 = vld [vmem:[#allocation7] sm:$0xff]
    %v54 = vld [vmem:[#allocation7 + $0x8] sm:$0xff]
    %v55 = vld [vmem:[#allocation7 + $0x10] sm:$0xf]
    %vm56 = vcmask 162816
    %v58 = vsel %vm56, %v52, 0
    %vm60 = vcmask 1043456
    %v62 = vsel %vm60, %v55, 0
    %64 = vmatprep.subr.mxu0 0.0
    %65 = vmatpush1.msra.mxu0 %v53
    %66 = vmatprep.subr.mxu0 0.0
    %67 = vmatpush1.msra.mxu0 %v54
    %68 = vmatprep.subr.mxu0 0.0
    %69 = vmatpush1.msra.mxu0 %v62
    %70 = vmatprep.subr.mxu0 0.0
    %71 = vmatpush1.msra.mxu0 0.0
    %72 = vmatprep.subr.mxu0 0.0
    %73 = vmatpush1.msra.mxu0 0.0
    %74 = vmatprep.subr.mxu0 0.0
    %75 = vmatpush1.msra.mxu0 0.0
    %76 = vmatprep.subr.mxu0 0.0
    %77 = vmatpush1.msra.mxu0 0.0
    %78 = vmatprep.subr.mxu0 0.0
    %79 = vmatpush1.msra.mxu0 0.0
    %80 = vmatprep.subr.mxu0 0.0
    %81 = vmatpush1.msra.mxu0 0.0
    %82 = vmatprep.subr.mxu0 0.0
    %83 = vmatpush1.msra.mxu0 0.0
    %84 = vmatprep.subr.mxu0 0.0
    %85 = vmatpush1.msra.mxu0 0.0
    %86 = vmatprep.subr.mxu0 0.0
    %87 = vmatpush1.msra.mxu0 0.0
    %88 = vmatprep.subr.mxu0 0.0
    %89 = vmatpush1.msra.mxu0 0.0
    %90 = vmatprep.subr.mxu0 0.0
    %91 = vmatpush1.msra.mxu0 0.0
    %92 = vmatprep.subr.mxu0 0.0
    %93 = vmatpush1.msra.mxu0 0.0
    %94 = vmatprep.subr.mxu0 0.0
    %95 = vmatpush1.msra.mxu0 0.0
    %96 = vmatprep.subr.mxu0 0.0
    %97 = vmatpush1.msra.mxu0 0.0
    %98 = vmatprep.subr.mxu0 0.0
    %99 = vmatpush1.msra.mxu0 0.0
    %100 = vmatprep.subr.mxu0 0.0
    %101 = vmatpush1.msra.mxu0 0.0
    %102 = vmatprep.subr.mxu0 0.0
    %103 = vmatpush1.msra.mxu0 0.0
    %104 = vmatprep.subr.mxu0 0.0
    %105 = vmatpush1.msra.mxu0 0.0
    %106 = vmatprep.subr.mxu0 0.0
    %107 = vmatpush1.msra.mxu0 0.0
    %108 = vmatprep.subr.mxu0 0.0
    %109 = vmatpush1.msra.mxu0 0.0
    %110 = vmatprep.subr.mxu0 0.0
    %111 = vmatpush1.msra.mxu0 0.0
    %112 = vmatprep.subr.mxu0 0.0
    %113 = vmatpush1.msra.mxu0 0.0
    %114 = vmatprep.subr.mxu0 0.0
    %115 = vmatpush1.msra.mxu0 0.0
    %116 = vmatprep.subr.mxu0 0.0
    %117 = vmatpush1.msra.mxu0 0.0
    %118 = vmatprep.subr.mxu0 0.0
    %119 = vmatpush1.msra.mxu0 0.0
    %120 = vmatprep.subr.mxu0 0.0
    %121 = vmatpush1.msra.mxu0 0.0
    %122 = vmatprep.subr.mxu0 0.0
    %123 = vmatpush1.msra.mxu0 0.0
    %124 = vmatprep.subr.mxu0 0.0
    %125 = vmatpush1.msra.mxu0 0.0
    %126 = vmatprep.subr.mxu0 0.0
    %127 = vmatpush1.msra.mxu0 0.0
    %128 = vmatprep.mubr.f32.mxu0 0.0
    %129 = vmatmul.mubr.f32.gmra.mrb[0].mxu0 %v58
    %v130 = vpop.f32.mrb[0].mxu0
    %v131 = vadd.f32 0.0, %v130
    %v132 = vpop.f32.mrb[0].mxu0
    %133 = vdwg.mxu0
    %v134 = vld [vmem:[#allocation2] sm:$0xf]
    %v135 = vadd.f32 %v134, %v131
    %136 = vst [vmem:[#allocation8] sm:$0xf] %v135
    // Predicated region
    $region26: #{tpu_custom_call.1} parent=1 // pred_check
      _
    $region27: #{tpu_custom_call.1} parent=1 // pred_check_branch
      %138 = sbr.rel (0) target = $region29
    $region28: #{tpu_custom_call.1} parent=1 // pred_region
      %s140 = ssub.s32 64, 64
      %141 = vsyncadd [#allocation4], %s140
      %s143 = sshll.u32 [#allocation8], 4
      %s144 = int_to_ptr.vmem [resolvable:$true] %s143
      %146 = dma.vmem_to_hbm [thread:$0]  %s144, 64, %s3, [#allocation4]
    $region29: #{tpu_custom_call.1} parent=1 // pred_fallthru
      _
    // Predicated region
    $region30: #{tpu_custom_call.1} parent=1 // pred_check
      _
    $region31: #{tpu_custom_call.1} parent=1 // pred_check_branch
      %148 = sbr.rel (0) target = $region33
    $region32: #{tpu_custom_call.1} parent=1 // pred_region
      %149 = dma.done [#allocation4], 64
    $region33: #{tpu_custom_call.1} parent=1 // pred_fallthru
      _
    %150 = vsyncpa [#allocation3], 1
    %151 = vsyncpa [#allocation6], 1
    %152 = vsyncpa [#allocation4], 1

</llo_original>
